<compile_context>
chip_gen: v6e
topology: v6e:2x2x1
jax: 0.10.0
libtpu: 0.0.40
codegen_flags: <defaults>
</compile_context>

<pallas_src>
import math

import jax
import jax.numpy as jnp
from jax.experimental import pallas as pl
from jax.experimental.pallas import tpu as pltpu


def _ffn_kernel(x_ref, w1_ref, b1_ref, w2_ref, b2_ref, o_ref, acc_ref):
    # x_ref: (tm, C)   w1_ref: (C, th)   b1_ref: (1, th)
    # w2_ref: (th, C)  b2_ref: (1, C)    o_ref: (tm, C)   acc_ref: (tm, C) f32
    h_step = pl.program_id(1)

    @pl.when(h_step == 0)
    def _init():
        acc_ref[...] = jnp.zeros_like(acc_ref)

    # First projection + bias + ReLU for this hidden chunk (f32 MXU accumulation).
    h = jnp.dot(x_ref[...], w1_ref[...], preferred_element_type=jnp.float32)
    h = jnp.maximum(h + b1_ref[...].astype(jnp.float32), 0.0)

    # Second projection for this chunk; cast activation to the weight dtype so
    # bf16 weights keep the MXU in bf16 mode (no-op for f32), accumulate in f32.
    acc_ref[...] += jnp.dot(
        h.astype(w2_ref.dtype), w2_ref[...], preferred_element_type=jnp.float32
    )

    @pl.when(h_step == pl.num_programs(1) - 1)
    def _finalize():
        out = acc_ref[...] + b2_ref[...].astype(jnp.float32)
        o_ref[...] = out.astype(o_ref.dtype)


def _round_up(x, m):
    return (x + m - 1) // m * m


def _vmem_capacity_bytes():
    try:
        return int(pltpu.get_tpu_info().vmem_capacity_bytes)
    except Exception:
        return 128 * 1024 * 1024  # conservative v5e/v6e default


def _hidden_chunk(H, max_chunk=512):
    """Largest lane-dense (multiple-of-128) divisor of H that is <= max_chunk."""
    if H <= max_chunk:
        return H
    for th in range(max_chunk, 0, -128):
        if H % th == 0:
            return th
    return H


def _spec(shape, index_map, *, buffers=None):
    """BlockSpec; optionally single-buffered when the block never changes."""
    if buffers is not None:
        try:
            return pl.BlockSpec(shape, index_map, pipeline_mode=pl.Buffered(buffers))
        except (TypeError, AttributeError):  # older jax without pipeline_mode
            pass
    return pl.BlockSpec(shape, index_map)


def feed_forward(x, w1, b1, w2, b2, *, block_rows=None):
    """x: (B, T, C); w1: (C, 4C); b1: (4C,); w2: (4C, C); b2: (C,) -> (B, T, C)."""
    B, T, C = x.shape
    H = w1.shape[1]
    M = B * T

    x2 = x.reshape(M, C)
    b1_2 = b1.reshape(1, H)
    b2_2 = b2.reshape(1, C)

    x_iz = jnp.dtype(x.dtype).itemsize
    w_iz = jnp.dtype(w1.dtype).itemsize

    # ---- per-generation VMEM budget and tile sizing ------------------------
    vmem_cap = _vmem_capacity_bytes()
    vmem_limit = (vmem_cap * 13) // 16  # ~104 MiB on 128 MiB parts, ~52 MiB on v7x
    if block_rows is None:
        block_rows = 512 if vmem_cap >= 96 * 1024 * 1024 else 256

    th = _hidden_chunk(H)  # bounds the f32 intermediate to (tm, th)
    num_h = H // th

    if M >= block_rows:
        tm = block_rows  # multiple of 256 -> full MXU passes; ragged tail masked
    else:
        # Single row tile.  A full-extent block is always layout-legal, so no
        # host-side padding / slicing (saves 2*M*C*itemsize of HBM traffic).
        tm = M

    def _vmem_bytes(tm_, th_, nh_):
        wbuf = 1 if nh_ == 1 else 2  # weights single-buffered only when resident
        return (
            2 * tm_ * C * x_iz                         # x tile (double-buffered)
            + 2 * tm_ * C * x_iz                       # out tile
            + wbuf * (C * th_ + th_ * C + th_) * w_iz  # W1 + W2 + b1 chunks
            + C * w_iz                                 # b2 (resident)
            + tm_ * C * 4                              # f32 accumulator
        )

    # Leave headroom for compiler scratch / pipeline internals.
    budget = (vmem_limit * 3) // 4
    while _vmem_bytes(tm, th, num_h) > budget and th > 128 and (th // 2) % 128 == 0:
        th //= 2
        num_h = H // th
    while _vmem_bytes(tm, th, num_h) > budget and tm >= 128:
        tm //= 2

    num_m = pl.cdiv(M, tm)
    grid = (num_m, num_h)

    # Single-buffer blocks whose index never changes across the whole grid;
    # hidden-chunked weights stay double-buffered so DMA overlaps compute.
    w_buffers = 1 if num_h == 1 else None

    in_specs = [
        pl.BlockSpec((tm, C), lambda i, h: (i, 0)),              # x (resident over h)
        _spec((C, th), lambda i, h: (0, h), buffers=w_buffers),  # W1 chunk
        _spec((1, th), lambda i, h: (0, h), buffers=w_buffers),  # b1 chunk
        _spec((th, C), lambda i, h: (h, 0), buffers=w_buffers),  # W2 chunk
        _spec((1, C), lambda i, h: (0, 0), buffers=1),           # b2 (resident)
    ]
    out_specs = pl.BlockSpec((tm, C), lambda i, h: (i, 0))

    # Advisory cost hint (per-array itemsizes; chunked weights re-stream per row tile).
    w_reads = num_m if num_h > 1 else 1
    bytes_accessed = (
        x2.size * x_iz
        + M * C * x_iz
        + (w1.size + b1.size + w2.size) * w_iz * w_reads
        + b2.size * w_iz
    )
    cost = pl.CostEstimate(
        flops=4 * M * C * H, transcendentals=0, bytes_accessed=int(bytes_accessed)
    )

    out = pl.pallas_call(
        _ffn_kernel,
        out_shape=jax.ShapeDtypeStruct((M, C), x.dtype),
        grid_spec=pltpu.PrefetchScalarGridSpec(
            num_scalar_prefetch=0,
            grid=grid,
            in_specs=in_specs,
            out_specs=out_specs,
            scratch_shapes=[pltpu.VMEM((tm, C), jnp.float32)],
        ),
        compiler_params=pltpu.CompilerParams(
            dimension_semantics=("parallel", "arbitrary"),
            vmem_limit_bytes=int(vmem_limit),
        ),
        cost_estimate=cost,
    )(x2, w1, b1_2, w2, b2_2)

    return out.reshape(B, T, C)


def _reference(x, w1, b1, w2, b2):
    """Pure-JAX reference matching the PyTorch forward exactly."""
    h = jnp.maximum(x @ w1 + b1, 0.0)
    return h @ w2 + b2


def _make_params(key, C, H, dtype=jnp.float32):
    k1, k2, k3, k4 = jax.random.split(key, 4)
    bound1 = 1.0 / math.sqrt(C)
    w1 = jax.random.uniform(k1, (C, H), dtype, -bound1, bound1)
    b1 = jax.random.uniform(k2, (H,), dtype, -bound1, bound1)
    bound2 = 1.0 / math.sqrt(H)
    w2 = jax.random.uniform(k3, (H, C), dtype, -bound2, bound2)
    b2 = jax.random.uniform(k4, (C,), dtype, -bound2, bound2)
    return w1, b1, w2, b2


if __name__ == "__main__":
    key = jax.random.PRNGKey(0)

    # Small shape matching the module: B=2, T=8, dim_embed=32 (hidden = 128).
    B, T, C = 2, 8, 32
    H = 4 * C
    kx, kp = jax.random.split(key)
    x = jax.random.normal(kx, (B, T, C), dtype=jnp.float32)
    w1, b1, w2, b2 = _make_params(kp, C, H)

    out = jax.block_until_ready(feed_forward(x, w1, b1, w2, b2))
    ref = _reference(x, w1, b1, w2, b2)
    assert out.shape == (B, T, C)
    assert jnp.allclose(out, ref, atol=1e-5, rtol=1e-5)

    # Second check exercising the hidden-dim chunk loop (C=256 -> H=1024, 2 chunks).
    C2 = 256
    H2 = 4 * C2
    kx2, kp2 = jax.random.split(jax.random.PRNGKey(1))
    x2 = jax.random.normal(kx2, (B, T, C2), dtype=jnp.float32)
    w1b, b1b, w2b, b2b = _make_params(kp2, C2, H2)

    out2 = jax.block_until_ready(feed_forward(x2, w1b, b1b, w2b, b2b))
    ref2 = _reference(x2, w1b, b1b, w2b, b2b)
    assert out2.shape == (B, T, C2)
    assert jnp.allclose(out2, ref2, atol=2e-5, rtol=2e-5)

    print("KERNEL_OK")
</pallas_src>

<mosaic_0001>
module attributes {stable_mosaic.version = 11 : i64} {
  func.func @_ffn_kernel(%arg0: i32, %arg1: i32, %arg2: memref<16x32xf32, #tpu.memory_space<vmem>>, %arg3: memref<32x128xf32, #tpu.memory_space<vmem>>, %arg4: memref<1x128xf32, #tpu.memory_space<vmem>>, %arg5: memref<128x32xf32, #tpu.memory_space<vmem>>, %arg6: memref<1x32xf32, #tpu.memory_space<vmem>>, %arg7: memref<16x32xf32, #tpu.memory_space<vmem>>, %arg8: memref<16x32xf32, #tpu.memory_space<vmem>>) attributes {dimension_semantics = [#tpu.dimension_semantics<parallel>, #tpu.dimension_semantics<arbitrary>], iteration_bounds = array<i64: 1, 1>, scalar_prefetch = 0 : i64, scratch_operands = 1 : i64, tpu.core_type = #tpu.core_type<tc>, window_params = [{transform_indices = @transform_0, window_bounds = array<i64: 16, 32>}, {pipeline_mode = #tpu.pipeline_mode<synchronous>, transform_indices = @transform_1, window_bounds = array<i64: 32, 128>}, {pipeline_mode = #tpu.pipeline_mode<synchronous>, transform_indices = @transform_2, window_bounds = array<i64: 1, 128>}, {pipeline_mode = #tpu.pipeline_mode<synchronous>, transform_indices = @transform_3, window_bounds = array<i64: 128, 32>}, {pipeline_mode = #tpu.pipeline_mode<synchronous>, transform_indices = @transform_4, window_bounds = array<i64: 1, 32>}, {transform_indices = @transform_5, window_bounds = array<i64: 16, 32>}]} {
    %c0_i32 = arith.constant 0 : i32
    %0 = arith.cmpi eq, %arg1, %c0_i32 : i32
    %1 = arith.extui %0 : i1 to i32
    %c0_i32_0 = arith.constant 0 : i32
    %2 = arith.cmpi ne, %1, %c0_i32_0 : i32
    scf.if %2 {
      %cst_16 = arith.constant 0.000000e+00 : f32
      %19 = vector.broadcast %cst_16 : f32 to vector<16x32xf32>
      %c0_17 = arith.constant 0 : index
      %c0_18 = arith.constant 0 : index
      %20 = vector.load %arg8[%c0_17, %c0_18] : memref<16x32xf32, #tpu.memory_space<vmem>>, vector<16x32xf32>
      tpu.vector_store %arg8[%c0_17, %c0_18], %19 {strides = array<i32>} : memref<16x32xf32, #tpu.memory_space<vmem>>, vector<16x32xf32>,
    } else {
    }
    %c0 = arith.constant 0 : index
    %c0_1 = arith.constant 0 : index
    %3 = vector.load %arg2[%c0, %c0_1] : memref<16x32xf32, #tpu.memory_space<vmem>>, vector<16x32xf32>
    %c0_2 = arith.constant 0 : index
    %c0_3 = arith.constant 0 : index
    %4 = vector.load %arg3[%c0_2, %c0_3] : memref<32x128xf32, #tpu.memory_space<vmem>>, vector<32x128xf32>
    %cst = arith.constant dense<0.000000e+00> : vector<16x128xf32>
    %5 = tpu.matmul %3, %4, %cst {dimension_numbers = #tpu.dot_dimension_numbers<[1], [0], [0], [1], [0, 0, 1, 1], [], []>} : vector<16x32xf32>, vector<32x128xf32>, vector<16x128xf32> -> vector<16x128xf32>
    %c0_4 = arith.constant 0 : index
    %c0_5 = arith.constant 0 : index
    %6 = vector.load %arg4[%c0_4, %c0_5] : memref<1x128xf32, #tpu.memory_space<vmem>>, vector<1x128xf32>
    %7 = vector.broadcast %6 : vector<1x128xf32> to vector<16x128xf32>
    %8 = arith.addf %5, %7 : vector<16x128xf32>
    %cst_6 = arith.constant 0.000000e+00 : f32
    %9 = vector.broadcast %cst_6 : f32 to vector<16x128xf32>
    %10 = arith.maximumf %8, %9 : vector<16x128xf32>
    %c0_7 = arith.constant 0 : index
    %c0_8 = arith.constant 0 : index
    %11 = vector.load %arg8[%c0_7, %c0_8] : memref<16x32xf32, #tpu.memory_space<vmem>>, vector<16x32xf32>
    %c0_9 = arith.constant 0 : index
    %c0_10 = arith.constant 0 : index
    %12 = vector.load %arg5[%c0_9, %c0_10] : memref<128x32xf32, #tpu.memory_space<vmem>>, vector<128x32xf32>
    %cst_11 = arith.constant dense<0.000000e+00> : vector<16x32xf32>
    %13 = tpu.matmul %10, %12, %cst_11 {dimension_numbers = #tpu.dot_dimension_numbers<[1], [0], [0], [1], [0, 0, 1, 1], [], []>} : vector<16x128xf32>, vector<128x32xf32>, vector<16x32xf32> -> vector<16x32xf32>
    %14 = arith.addf %11, %13 : vector<16x32xf32>
    %c0_12 = arith.constant 0 : index
    %c0_13 = arith.constant 0 : index
    %15 = vector.load %arg8[%c0_12, %c0_13] : memref<16x32xf32, #tpu.memory_space<vmem>>, vector<16x32xf32>
    tpu.vector_store %arg8[%c0_12, %c0_13], %14 {strides = array<i32>} : memref<16x32xf32, #tpu.memory_space<vmem>>, vector<16x32xf32>,
    %c0_i32_14 = arith.constant 0 : i32
    %16 = arith.cmpi eq, %arg1, %c0_i32_14 : i32
    %17 = arith.extui %16 : i1 to i32
    %c0_i32_15 = arith.constant 0 : i32
    %18 = arith.cmpi ne, %17, %c0_i32_15 : i32
    scf.if %18 {
      %c0_16 = arith.constant 0 : index
      %c0_17 = arith.constant 0 : index
      %19 = vector.load %arg8[%c0_16, %c0_17] : memref<16x32xf32, #tpu.memory_space<vmem>>, vector<16x32xf32>
      %c0_18 = arith.constant 0 : index
      %c0_19 = arith.constant 0 : index
      %20 = vector.load %arg6[%c0_18, %c0_19] : memref<1x32xf32, #tpu.memory_space<vmem>>, vector<1x32xf32>
      %21 = vector.broadcast %20 : vector<1x32xf32> to vector<16x32xf32>
      %22 = arith.addf %19, %21 : vector<16x32xf32>
      %c0_20 = arith.constant 0 : index
      %c0_21 = arith.constant 0 : index
      %23 = vector.load %arg7[%c0_20, %c0_21] : memref<16x32xf32, #tpu.memory_space<vmem>>, vector<16x32xf32>
      tpu.vector_store %arg7[%c0_20, %c0_21], %22 {strides = array<i32>} : memref<16x32xf32, #tpu.memory_space<vmem>>, vector<16x32xf32>,
    } else {
    }
    return
  }
  func.func @transform_0(%arg0: i32, %arg1: i32) -> (i32, i32) {
    %c0_i32 = arith.constant 0 : i32
    %c0_i32_0 = arith.constant 0 : i32
    return %arg0, %c0_i32 : i32, i32
  }
  func.func @transform_1(%arg0: i32, %arg1: i32) -> (i32, i32) {
    %c0_i32 = arith.constant 0 : i32
    %c0_i32_0 = arith.constant 0 : i32
    return %c0_i32, %arg1 : i32, i32
  }
  func.func @transform_2(%arg0: i32, %arg1: i32) -> (i32, i32) {
    %c0_i32 = arith.constant 0 : i32
    %c0_i32_0 = arith.constant 0 : i32
    return %c0_i32, %arg1 : i32, i32
  }
  func.func @transform_3(%arg0: i32, %arg1: i32) -> (i32, i32) {
    %c0_i32 = arith.constant 0 : i32
    %c0_i32_0 = arith.constant 0 : i32
    return %arg1, %c0_i32 : i32, i32
  }
  func.func @transform_4(%arg0: i32, %arg1: i32) -> (i32, i32) {
    %c0_i32 = arith.constant 0 : i32
    %c0_i32_0 = arith.constant 0 : i32
    %c0_i32_1 = arith.constant 0 : i32
    return %c0_i32, %c0_i32_0 : i32, i32
  }
  func.func @transform_5(%arg0: i32, %arg1: i32) -> (i32, i32) {
    %c0_i32 = arith.constant 0 : i32
    %c0_i32_0 = arith.constant 0 : i32
    return %arg0, %c0_i32 : i32, i32
  }
}

</mosaic_0001>

<llo_original>
// kernel: tpu_custom_call.1
$region0: #{tpu_custom_call.1}
  #allocation0 [shape = 'u32[]', space=smem, size = 0x4, offset = 0x4, fixed_abs, tag = 'smem constant byte address 0x4 - core index']
  #allocation1 [shape = 'u32[144,128]{1,0:T(1,128)}', space=vmem, size = 0x12000, scoped, tag = 'internal scratch']
  #allocation2 [shape = 'f32[16,32]{1,0:T(8,128)}', space=vmem, size = 0x2000, scoped, tag = 'scratch operand']
  %s0 = inlined_call_operand.vmem [shape: f32[16,32], index: 0, kind: input, shape index: {}]
  %s1 = inlined_call_operand.vmem [shape: f32[32,128], index: 1, kind: input, shape index: {}]
  %s2 = inlined_call_operand.vmem [shape: f32[1,128], index: 2, kind: input, shape index: {}]
  %s3 = inlined_call_operand.vmem [shape: f32[128,32], index: 3, kind: input, shape index: {}]
  %s4 = inlined_call_operand.vmem [shape: f32[1,32], index: 4, kind: input, shape index: {}]
  %s5 = inlined_call_operand.hbm [shape: f32[16,32], index: 5, kind: output, shape index: {}]
  %s6 = sld [smem:[#allocation0]]
  $region38: #{tpu_custom_call.1} parent=0
    _
  %s8 = ssub.s32 1, %s6
  %s9 = scalar_select 0, %s8, %s6
  $region1: #{tpu_custom_call.1} parent=0
    #allocation3 [shape = 'u8[8192]{0}', space=vmem, size = 0x2000, scoped, tag = 'output window, operand 0, single buffered']
    #allocation4 [shape = 's32[1]{0}', space=sflag, size = 0x4, scoped, tag = 'scoped memory for tpu_custom_call.1']
    %10 = vsyncpa [#allocation4], 0
    // Predicated region
    $region2: #{tpu_custom_call.1} parent=1 // pred_check
      _
    $region3: #{tpu_custom_call.1} parent=1 // pred_check_branch
      %12 = sbr.rel (0) target = $region5
    $region4: #{tpu_custom_call.1} parent=1 // pred_region
      _
    $region5: #{tpu_custom_call.1} parent=1 // pred_fallthru
      _
    // Predicated region
    $region6: #{tpu_custom_call.1} parent=1 // pred_check
      _
    $region7: #{tpu_custom_call.1} parent=1 // pred_check_branch
      %14 = sbr.rel (0) target = $region9
    $region8: #{tpu_custom_call.1} parent=1 // pred_region
      _
    $region9: #{tpu_custom_call.1} parent=1 // pred_fallthru
      _
    // Predicated region
    $region10: #{tpu_custom_call.1} parent=1 // pred_check
      _
    $region11: #{tpu_custom_call.1} parent=1 // pred_check_branch
      %16 = sbr.rel (0) target = $region13
    $region12: #{tpu_custom_call.1} parent=1 // pred_region
      _
    $region13: #{tpu_custom_call.1} parent=1 // pred_fallthru
      _
    // Predicated region
    $region14: #{tpu_custom_call.1} parent=1 // pred_check
      _
    $region15: #{tpu_custom_call.1} parent=1 // pred_check_branch
      %18 = sbr.rel (0) target = $region17
    $region16: #{tpu_custom_call.1} parent=1 // pred_region
      _
    $region17: #{tpu_custom_call.1} parent=1 // pred_fallthru
      _
    // Predicated region
    $region18: #{tpu_custom_call.1} parent=1 // pred_check
      _
    $region19: #{tpu_custom_call.1} parent=1 // pred_check_branch
      %20 = sbr.rel (0) target = $region21
    $region20: #{tpu_custom_call.1} parent=1 // pred_region
      _
    $region21: #{tpu_custom_call.1} parent=1 // pred_fallthru
      _
    %p21 = scmp.eq.s32.totalorder 0, 0
    // Predicated region
    $region22: #{tpu_custom_call.1} parent=1 // pred_check
      %p22 = pneg %p21
    $region23: #{tpu_custom_call.1} parent=1 // pred_check_branch
      %24 = sbr.rel (%p22) target = $region25
    $region24: #{tpu_custom_call.1} parent=1 // pred_region
      %vm25 = vcmask 261120
      %26 = vst.msk [vmem:[#allocation2] sm:$0xff] %vm25, 0.0
      %27 = vst.msk [vmem:[#allocation2 + $0x8] sm:$0xff] %vm25, 0.0
    $region25: #{tpu_custom_call.1} parent=1 // pred_fallthru
      _
    %v28 = vld [vmem:[%s0] sm:$0xff]
    %v29 = vld [vmem:[%s0 + $0x8] sm:$0xff]
    %v30 = vld [vmem:[%s1] sm:$0xff]
    %v31 = vld [vmem:[%s1 + $0x8] sm:$0xff]
    %v32 = vld [vmem:[%s1 + $0x10] sm:$0xff]
    %v33 = vld [vmem:[%s1 + $0x18] sm:$0xff]
    %v34 = vld [vmem:[%s2] sm:$0x1]
    %v36 = vlaneseq
    %v37 = vshrl.u32 %v36, 7
    %v38 = vsub.s32 0, %v37
    %v39 = vrot.slane %v34, %v38
    %vm41 = vcmask 261120
    %v43 = vsel %vm41, %v28, 0
    %v46 = vsel %vm41, %v29, 0
    %48 = vmatprep.subr.mxu0 0.0
    %49 = vmatpush1.msra.mxu0 0.0
    %50 = vmatprep.subr.mxu0 0.0
    %51 = vmatpush1.msra.mxu0 0.0
    %52 = vmatprep.subr.mxu0 0.0
    %53 = vmatpush1.msra.mxu0 0.0
    %54 = vmatprep.subr.mxu0 0.0
    %55 = vmatpush1.msra.mxu0 0.0
    %56 = vmatprep.subr.mxu0 0.0
    %57 = vmatpush1.msra.mxu0 0.0
    %58 = vmatprep.subr.mxu0 0.0
    %59 = vmatpush1.msra.mxu0 0.0
    %60 = vmatprep.subr.mxu0 0.0
    %61 = vmatpush1.msra.mxu0 0.0
    %62 = vmatprep.subr.mxu0 0.0
    %63 = vmatpush1.msra.mxu0 0.0
    %64 = vmatprep.subr.mxu0 0.0
    %65 = vmatpush1.msra.mxu0 0.0
    %66 = vmatprep.subr.mxu0 0.0
    %67 = vmatpush1.msra.mxu0 0.0
    %68 = vmatprep.subr.mxu0 0.0
    %69 = vmatpush1.msra.mxu0 0.0
    %70 = vmatprep.subr.mxu0 0.0
    %71 = vmatpush1.msra.mxu0 0.0
    %72 = vmatprep.subr.mxu0 0.0
    %73 = vmatpush1.msra.mxu0 %v33
    %74 = vmatprep.subr.mxu0 0.0
    %75 = vmatpush1.msra.mxu0 %v32
    %76 = vmatprep.subr.mxu0 0.0
    %77 = vmatpush1.msra.mxu0 %v31
    %78 = vmatprep.subr.mxu0 0.0
    %79 = vmatpush1.msra.mxu0 %v30
    %80 = vmatprep.subr.mxu0 0.0
    %81 = vmatpush2.msra.mxu0 0.0
    %82 = vmatprep.subr.mxu0 0.0
    %83 = vmatpush2.msra.mxu0 0.0
    %84 = vmatprep.subr.mxu0 0.0
    %85 = vmatpush2.msra.mxu0 0.0
    %86 = vmatprep.subr.mxu0 0.0
    %87 = vmatpush2.msra.mxu0 0.0
    %88 = vmatprep.subr.mxu0 0.0
    %89 = vmatpush2.msra.mxu0 0.0
    %90 = vmatprep.subr.mxu0 0.0
    %91 = vmatpush2.msra.mxu0 0.0
    %92 = vmatprep.subr.mxu0 0.0
    %93 = vmatpush2.msra.mxu0 0.0
    %94 = vmatprep.subr.mxu0 0.0
    %95 = vmatpush2.msra.mxu0 0.0
    %96 = vmatprep.subr.mxu0 0.0
    %97 = vmatpush2.msra.mxu0 0.0
    %98 = vmatprep.subr.mxu0 0.0
    %99 = vmatpush2.msra.mxu0 0.0
    %100 = vmatprep.subr.mxu0 0.0
    %101 = vmatpush2.msra.mxu0 0.0
    %102 = vmatprep.subr.mxu0 0.0
    %103 = vmatpush2.msra.mxu0 0.0
    %104 = vmatprep.subr.mxu0 0.0
    %105 = vmatpush2.msra.mxu0 0.0
    %106 = vmatprep.subr.mxu0 0.0
    %107 = vmatpush2.msra.mxu0 0.0
    %108 = vmatprep.subr.mxu0 0.0
    %109 = vmatpush2.msra.mxu0 0.0
    %110 = vmatprep.subr.mxu0 0.0
    %111 = vmatpush2.msra.mxu0 0.0
    %112 = vmatprep.mubr.f32.mxu0 0.0
    %113 = vmatmul.mubr.f32.gmra.mxu0 %v43
    %v114 = vpop.f32.mrf.mxu0
    %v115 = vadd.f32 %v39, %v114
    %v116 = vpop.f32.mrf.mxu0
    %117 = vmatprep.mubr.f32.mxu0 0.0
    %118 = vmatmul.mubr.f32.gmra.mxu0 %v46
    %v119 = vpop.f32.mrf.mxu0
    %v120 = vadd.f32 %v39, %v119
    %v121 = vpop.f32.mrf.mxu0
    %122 = vdwg.mxu0
    %v123 = vmax.f32 %v115, 0.0
    %v124 = vmax.f32 %v120, 0.0
    %v125 = vld [vmem:[#allocation2] sm:$0xff]
    %v126 = vld [vmem:[#allocation2 + $0x8] sm:$0xff]
    %v127 = vld [vmem:[%s3] sm:$0xff]
    %v128 = vld [vmem:[%s3 + $0x8] sm:$0xff]
    %v129 = vld [vmem:[%s3 + $0x10] sm:$0xff]
    %v130 = vld [vmem:[%s3 + $0x18] sm:$0xff]
    %v131 = vld [vmem:[%s3 + $0x20] sm:$0xff]
    %v132 = vld [vmem:[%s3 + $0x28] sm:$0xff]
    %v133 = vld [vmem:[%s3 + $0x30] sm:$0xff]
    %v134 = vld [vmem:[%s3 + $0x38] sm:$0xff]
    %v135 = vld [vmem:[%s3 + $0x40] sm:$0xff]
    %v136 = vld [vmem:[%s3 + $0x48] sm:$0xff]
    %v137 = vld [vmem:[%s3 + $0x50] sm:$0xff]
    %v138 = vld [vmem:[%s3 + $0x58] sm:$0xff]
    %v139 = vld [vmem:[%s3 + $0x60] sm:$0xff]
    %v140 = vld [vmem:[%s3 + $0x68] sm:$0xff]
    %v141 = vld [vmem:[%s3 + $0x70] sm:$0xff]
    %v142 = vld [vmem:[%s3 + $0x78] sm:$0xff]
    %143 = vmatprep.subr.mxu0 0.0
    %144 = vmatpush1.msra.mxu0 %v142
    %145 = vmatprep.subr.mxu0 0.0
    %146 = vmatpush1.msra.mxu0 %v141
    %147 = vmatprep.subr.mxu0 0.0
    %148 = vmatpush1.msra.mxu0 %v140
    %149 = vmatprep.subr.mxu0 0.0
    %150 = vmatpush1.msra.mxu0 %v139
    %151 = vmatprep.subr.mxu0 0.0
    %152 = vmatpush1.msra.mxu0 %v138
    %153 = vmatprep.subr.mxu0 0.0
    %154 = vmatpush1.msra.mxu0 %v137
    %155 = vmatprep.subr.mxu0 0.0
    %156 = vmatpush1.msra.mxu0 %v136
    %157 = vmatprep.subr.mxu0 0.0
    %158 = vmatpush1.msra.mxu0 %v135
    %159 = vmatprep.subr.mxu0 0.0
    %160 = vmatpush1.msra.mxu0 %v134
    %161 = vmatprep.subr.mxu0 0.0
    %162 = vmatpush1.msra.mxu0 %v133
    %163 = vmatprep.subr.mxu0 0.0
    %164 = vmatpush1.msra.mxu0 %v132
    %165 = vmatprep.subr.mxu0 0.0
    %166 = vmatpush1.msra.mxu0 %v131
    %167 = vmatprep.subr.mxu0 0.0
    %168 = vmatpush1.msra.mxu0 %v130
    %169 = vmatprep.subr.mxu0 0.0
    %170 = vmatpush1.msra.mxu0 %v129
    %171 = vmatprep.subr.mxu0 0.0
    %172 = vmatpush1.msra.mxu0 %v128
    %173 = vmatprep.subr.mxu0 0.0
    %174 = vmatpush1.msra.mxu0 %v127
    %175 = vmatprep.subr.mxu0 0.0
    %176 = vmatpush2.msra.mxu0 0.0
    %177 = vmatprep.subr.mxu0 0.0
    %178 = vmatpush2.msra.mxu0 0.0
    %179 = vmatprep.subr.mxu0 0.0
    %180 = vmatpush2.msra.mxu0 0.0
    %181 = vmatprep.subr.mxu0 0.0
    %182 = vmatpush2.msra.mxu0 0.0
    %183 = vmatprep.subr.mxu0 0.0
    %184 = vmatpush2.msra.mxu0 0.0
    %185 = vmatprep.subr.mxu0 0.0
    %186 = vmatpush2.msra.mxu0 0.0
    %187 = vmatprep.subr.mxu0 0.0
    %188 = vmatpush2.msra.mxu0 0.0
    %189 = vmatprep.subr.mxu0 0.0
    %190 = vmatpush2.msra.mxu0 0.0
    %191 = vmatprep.subr.mxu0 0.0
    %192 = vmatpush2.msra.mxu0 0.0
    %193 = vmatprep.subr.mxu0 0.0
    %194 = vmatpush2.msra.mxu0 0.0
    %195 = vmatprep.subr.mxu0 0.0
    %196 = vmatpush2.msra.mxu0 0.0
    %197 = vmatprep.subr.mxu0 0.0
    %198 = vmatpush2.msra.mxu0 0.0
    %199 = vmatprep.subr.mxu0 0.0
    %200 = vmatpush2.msra.mxu0 0.0
    %201 = vmatprep.subr.mxu0 0.0
    %202 = vmatpush2.msra.mxu0 0.0
    %203 = vmatprep.subr.mxu0 0.0
    %204 = vmatpush2.msra.mxu0 0.0
    %205 = vmatprep.subr.mxu0 0.0
    %206 = vmatpush2.msra.mxu0 0.0
    %207 = vmatprep.mubr.f32.mxu0 0.0
    %208 = vmatmul.mubr.f32.gmra.mxu0 %v123
    %v209 = vpop.f32.mrf.mxu0
    %v210 = vadd.f32 0.0, %v209
    %v211 = vpop.f32.mrf.mxu0
    %212 = vmatprep.mubr.f32.mxu0 0.0
    %213 = vmatmul.mubr.f32.gmra.mxu0 %v124
    %v214 = vpop.f32.mrf.mxu0
    %v215 = vadd.f32 0.0, %v214
    %v216 = vpop.f32.mrf.mxu0
    %217 = vdwg.mxu0
    %v218 = vadd.f32 %v125, %v210
    %v219 = vadd.f32 %v126, %v215
    %220 = vst.msk [vmem:[#allocation2] sm:$0xff] %vm41, %v218
    %221 = vst.msk [vmem:[#allocation2 + $0x8] sm:$0xff] %vm41, %v219
    // Predicated region
    $region26: #{tpu_custom_call.1} parent=1 // pred_check
      %p222 = pneg %p21
    $region27: #{tpu_custom_call.1} parent=1 // pred_check_branch
      %224 = sbr.rel (%p222) target = $region29
    $region28: #{tpu_custom_call.1} parent=1 // pred_region
      %v225 = vld [vmem:[#allocation2] sm:$0xff]
      %v226 = vld [vmem:[#allocation2 + $0x8] sm:$0xff]
      %v227 = vld [vmem:[%s4] sm:$0x1]
      %v229 = vlaneseq
      %v230 = vshrl.u32 %v229, 7
      %v231 = vsub.s32 0, %v230
      %v232 = vrot.slane %v227, %v231
      %v234 = vadd.f32 %v225, %v232
      %v235 = vadd.f32 %v226, %v232
      %236 = vst.msk [vmem:[#allocation3] sm:$0xff] %vm41, %v234
      %237 = vst.msk [vmem:[#allocation3 + $0x8] sm:$0xff] %vm41, %v235
    $region29: #{tpu_custom_call.1} parent=1 // pred_fallthru
      _
    // Predicated region
    $region30: #{tpu_custom_call.1} parent=1 // pred_check
      _
    $region31: #{tpu_custom_call.1} parent=1 // pred_check_branch
      %239 = sbr.rel (0) target = $region33
    $region32: #{tpu_custom_call.1} parent=1 // pred_region
      %s241 = ssub.s32 256, 256
      %242 = vsyncadd [#allocation4], %s241
      %s243 = sshll.u32 [#allocation3], 4
      %s244 = int_to_ptr.vmem [resolvable:$true] %s243
      %249 = dma.vmem_to_hbm [thread:$0]  %s244, 256, %s5, [#allocation4], 128, 128, 8
    $region33: #{tpu_custom_call.1} parent=1 // pred_fallthru
      _
    // Predicated region
    $region34: #{tpu_custom_call.1} parent=1 // pred_check
      _
    $region35: #{tpu_custom_call.1} parent=1 // pred_check_branch
      %251 = sbr.rel (0) target = $region37
    $region36: #{tpu_custom_call.1} parent=1 // pred_region
      %252 = dma.done [#allocation4], 256
    $region37: #{tpu_custom_call.1} parent=1 // pred_fallthru
      _
    %253 = vsyncpa [#allocation4], 1

</llo_original>
